<compile_context>
chip_gen: v7x
topology: tpu7x:2x2x1
jax: 0.10.0
libtpu: 0.0.40
codegen_flags: <defaults>
</compile_context>

<pallas_src>
import jax
import jax.numpy as jnp
from jax import lax
from jax.experimental import pallas as pl
from jax.experimental.pallas import tpu as pltpu

_LN_EPS = 1e-5  # PyTorch nn.LayerNorm default


def _discriminator_kernel(x_ref, w1_ref, b1_ref, g_ref, beta_ref, w2_ref,
                          b2_ref, o_ref):
    """Fused Linear -> LayerNorm -> ReLU -> Linear(1) -> tanh for one batch tile.

    x:   (tm, F)   input tile (native dtype, e.g. bf16 or f32)
    w1:  (F, H)    fc weight (JAX layout, native dtype)
    b1, g, beta, w2: (1, H)
    b2:  (1,) SMEM f32 scalar
    o:   (1, tm)   lane-dense output tile
    """
    # fc: (tm, F) @ (F, H) on the MXU; operands stay in their native dtype
    # (bf16 goes through the native bf16 MXU path), accumulate in f32.
    h = jnp.dot(x_ref[...], w1_ref[...], preferred_element_type=jnp.float32)
    h = h + b1_ref[...].astype(jnp.float32)

    # LayerNorm over the hidden dim (two-pass form for numerical stability).
    mean = jnp.mean(h, axis=-1, keepdims=True)
    hc = h - mean
    var = jnp.mean(hc * hc, axis=-1, keepdims=True)
    hn = hc * lax.rsqrt(var + _LN_EPS)
    hn = hn * g_ref[...].astype(jnp.float32) + beta_ref[...].astype(jnp.float32)

    # ReLU.
    hr = jnp.maximum(hn, 0.0)

    # head: (1, H) . (tm, H)^T -> (1, tm) on the MXU.  This lands the per-row
    # logits along lanes, so the output store below is lane-dense (unmasked
    # full-lane vst when row_tile is a multiple of 128).
    logits_row = lax.dot_general(
        w2_ref[...].astype(jnp.float32), hr,
        dimension_numbers=(((1,), (1,)), ((), ())),
        preferred_element_type=jnp.float32)  # (1, tm)

    o_ref[...] = jnp.tanh(logits_row + b2_ref[0]).astype(o_ref.dtype)


def _round_up(x, m):
    return (x + m - 1) // m * m


def discriminator_forward(obs, w1, b1, gamma, beta, w2, b2, *, max_row_tile=1024):
    """obs: (..., F); w1: (F, H); b1/gamma/beta/w2: (H,); b2: scalar.

    Returns (..., 1), matching the PyTorch module. Output dtype == obs dtype.
    """
    orig_batch_shape = obs.shape[:-1]
    feature_dim = obs.shape[-1]
    hidden_dim = w1.shape[1]

    x2 = obs.reshape(-1, feature_dim)
    batch = x2.shape[0]

    x_bytes = x2.dtype.itemsize
    w_bytes = w1.dtype.itemsize
    out_bytes = obs.dtype.itemsize

    def footprint(rt):
        est = 2 * rt * feature_dim * x_bytes            # double-buffered obs tile
        est += 2 * feature_dim * hidden_dim * w_bytes   # (double-)buffered w1
        est += 2 * rt * out_bytes                       # output row block
        est += 6 * rt * hidden_dim * 4                  # f32 LN temporaries
        est += 16 * hidden_dim * 4                      # small param rows
        return est

    budget = 40 * 1024 * 1024  # working budget that also fits v7x's 64 MiB VMEM

    if batch < 256:
        # Single full-extent block: no divisibility constraints for tiny batches.
        row_tile = max(batch, 1)
    else:
        # >= 2 grid steps so both v7x TensorCores get work; 128-aligned so the
        # lane-dense output block and obs-tile sublanes stay aligned.
        row_tile = min(max_row_tile, _round_up(pl.cdiv(batch, 2), 128))
        while row_tile > 128 and footprint(row_tile) > budget:
            row_tile //= 2

    b_pad = _round_up(batch, row_tile)
    if b_pad != batch:
        x2 = jnp.pad(x2, ((0, b_pad - batch), (0, 0)))
    num_tiles = b_pad // row_tile

    # Small parameter rows kept in their native dtype (no HBM-roundtrip casts);
    # only the scalar head bias is forced to an f32 SMEM scalar.
    b1r = b1.reshape(1, hidden_dim)
    gr = gamma.reshape(1, hidden_dim)
    betar = beta.reshape(1, hidden_dim)
    w2r = w2.reshape(1, hidden_dim)
    b2f = jnp.asarray(b2, jnp.float32).reshape(1)

    vmem_limit = int(min(48 * 1024 * 1024,
                         max(32 * 1024 * 1024, footprint(row_tile) * 5 // 4)))

    out = pl.pallas_call(
        _discriminator_kernel,
        out_shape=jax.ShapeDtypeStruct((1, b_pad), obs.dtype),  # lane-dense slab
        grid=(num_tiles,),
        in_specs=[
            pl.BlockSpec((row_tile, feature_dim), lambda i: (i, 0)),    # obs tile
            pl.BlockSpec((feature_dim, hidden_dim), lambda i: (0, 0)),  # w1
            pl.BlockSpec((1, hidden_dim), lambda i: (0, 0)),            # b1
            pl.BlockSpec((1, hidden_dim), lambda i: (0, 0)),            # gamma
            pl.BlockSpec((1, hidden_dim), lambda i: (0, 0)),            # beta
            pl.BlockSpec((1, hidden_dim), lambda i: (0, 0)),            # w2 (head)
            pl.BlockSpec(memory_space=pltpu.SMEM),                      # b2 (head bias)
        ],
        out_specs=pl.BlockSpec((1, row_tile), lambda i: (0, i)),
        compiler_params=pltpu.CompilerParams(
            dimension_semantics=("parallel",),  # megacore split on v7x
            vmem_limit_bytes=vmem_limit,
        ),
    )(x2, w1, b1r, gr, betar, w2r, b2f)

    out = out.reshape(-1)[:batch]
    return out.reshape(orig_batch_shape + (1,))


def _reference(obs, w1, b1, gamma, beta, w2, b2):
    """Pure-JAX reference of the PyTorch forward (f32, HIGHEST precision)."""
    obs = obs.astype(jnp.float32)
    w1 = w1.astype(jnp.float32)
    h = jnp.dot(obs, w1, precision=lax.Precision.HIGHEST) + b1
    mean = h.mean(-1, keepdims=True)
    var = ((h - mean) ** 2).mean(-1, keepdims=True)
    hn = (h - mean) / jnp.sqrt(var + _LN_EPS) * gamma + beta
    hr = jnp.maximum(hn, 0.0)
    return jnp.tanh(jnp.dot(hr, w2.reshape(-1, 1),
                            precision=lax.Precision.HIGHEST) + b2)


if __name__ == "__main__":
    key = jax.random.PRNGKey(0)
    batch, feature_dim, hidden_dim = 8, 32, 32
    ks = jax.random.split(key, 8)

    obs = jax.random.normal(ks[0], (batch, feature_dim), jnp.float32)
    w1 = 0.1 * jax.random.normal(ks[1], (feature_dim, hidden_dim), jnp.float32)
    b1 = 0.1 * jax.random.normal(ks[2], (hidden_dim,), jnp.float32)
    gamma = 1.0 + 0.1 * jax.random.normal(ks[3], (hidden_dim,), jnp.float32)
    beta = 0.1 * jax.random.normal(ks[4], (hidden_dim,), jnp.float32)
    w2 = 0.1 * jax.random.normal(ks[5], (hidden_dim,), jnp.float32)
    b2 = 0.1 * jax.random.normal(ks[6], (), jnp.float32)

    # Small batch -> single full-extent block.
    y = jax.block_until_ready(discriminator_forward(obs, w1, b1, gamma, beta, w2, b2))
    ref = _reference(obs, w1, b1, gamma, beta, w2, b2)
    assert y.shape == (batch, 1) and y.dtype == obs.dtype
    assert float(jnp.max(jnp.abs(y - ref))) < 1e-4

    # Larger ragged batch: exercises >=2 lane-dense, 128-aligned tiles + zero-pad tail.
    big_batch = 1300
    obs_big = jax.random.normal(ks[7], (big_batch, feature_dim), jnp.float32)
    y_big = jax.block_until_ready(
        discriminator_forward(obs_big, w1, b1, gamma, beta, w2, b2))
    ref_big = _reference(obs_big, w1, b1, gamma, beta, w2, b2)
    assert y_big.shape == (big_batch, 1)
    assert float(jnp.max(jnp.abs(y_big - ref_big))) < 1e-4

    # bf16 obs/weights feed the MXU natively (no up-cast path); looser tolerance.
    obs_bf = obs_big.astype(jnp.bfloat16)
    w1_bf = w1.astype(jnp.bfloat16)
    y_bf = jax.block_until_ready(
        discriminator_forward(obs_bf, w1_bf, b1, gamma, beta, w2, b2))
    ref_bf = _reference(obs_bf, w1_bf, b1, gamma, beta, w2, b2)
    assert y_bf.shape == (big_batch, 1) and y_bf.dtype == jnp.bfloat16
    assert float(jnp.max(jnp.abs(y_bf.astype(jnp.float32) - ref_bf))) < 5e-2

    print("KERNEL_OK")
</pallas_src>

<mosaic_0001>
module attributes {stable_mosaic.version = 11 : i64} {
  func.func @_discriminator_kernel(%arg0: i32, %arg1: memref<8x32xf32, #tpu.memory_space<vmem>>, %arg2: memref<32x32xf32, #tpu.memory_space<vmem>>, %arg3: memref<1x32xf32, #tpu.memory_space<vmem>>, %arg4: memref<1x32xf32, #tpu.memory_space<vmem>>, %arg5: memref<1x32xf32, #tpu.memory_space<vmem>>, %arg6: memref<1x32xf32, #tpu.memory_space<vmem>>, %arg7: memref<1xf32, #tpu.memory_space<smem>>, %arg8: memref<1x8xf32, #tpu.memory_space<vmem>>) attributes {dimension_semantics = [#tpu.dimension_semantics<parallel>], iteration_bounds = array<i64: 1>, scalar_prefetch = 0 : i64, scratch_operands = 0 : i64, tpu.core_type = #tpu.core_type<tc>, window_params = [{transform_indices = @transform_0, window_bounds = array<i64: 8, 32>}, {pipeline_mode = #tpu.pipeline_mode<synchronous>, transform_indices = @transform_1, window_bounds = array<i64: 32, 32>}, {pipeline_mode = #tpu.pipeline_mode<synchronous>, transform_indices = @transform_2, window_bounds = array<i64: 1, 32>}, {pipeline_mode = #tpu.pipeline_mode<synchronous>, transform_indices = @transform_3, window_bounds = array<i64: 1, 32>}, {pipeline_mode = #tpu.pipeline_mode<synchronous>, transform_indices = @transform_4, window_bounds = array<i64: 1, 32>}, {pipeline_mode = #tpu.pipeline_mode<synchronous>, transform_indices = @transform_5, window_bounds = array<i64: 1, 32>}, {transform_indices = @transform_6, window_bounds = array<i64: 1>}, {transform_indices = @transform_7, window_bounds = array<i64: 1, 8>}]} {
    %c0 = arith.constant 0 : index
    %c0_0 = arith.constant 0 : index
    %0 = vector.load %arg1[%c0, %c0_0] : memref<8x32xf32, #tpu.memory_space<vmem>>, vector<8x32xf32>
    %c0_1 = arith.constant 0 : index
    %c0_2 = arith.constant 0 : index
    %1 = vector.load %arg2[%c0_1, %c0_2] : memref<32x32xf32, #tpu.memory_space<vmem>>, vector<32x32xf32>
    %cst = arith.constant dense<0.000000e+00> : vector<8x32xf32>
    %2 = tpu.matmul %0, %1, %cst {dimension_numbers = #tpu.dot_dimension_numbers<[1], [0], [0], [1], [0, 0, 1, 1], [], []>} : vector<8x32xf32>, vector<32x32xf32>, vector<8x32xf32> -> vector<8x32xf32>
    %c0_3 = arith.constant 0 : index
    %c0_4 = arith.constant 0 : index
    %3 = vector.load %arg3[%c0_3, %c0_4] : memref<1x32xf32, #tpu.memory_space<vmem>>, vector<1x32xf32>
    %4 = vector.broadcast %3 : vector<1x32xf32> to vector<8x32xf32>
    %5 = arith.addf %2, %4 : vector<8x32xf32>
    %cst_5 = arith.constant dense<0.000000e+00> : vector<8xf32>
    %6 = vector.multi_reduction <add>, %5, %cst_5 [1] : vector<8x32xf32> to vector<8xf32>
    %7 = vector.shape_cast %6 : vector<8xf32> to vector<8x1xf32>
    %cst_6 = arith.constant 3.200000e+01 : f32
    %8 = vector.broadcast %cst_6 : f32 to vector<8x1xf32>
    %9 = arith.divf %7, %8 : vector<8x1xf32>
    %10 = vector.broadcast %9 : vector<8x1xf32> to vector<8x32xf32>
    %11 = arith.subf %5, %10 : vector<8x32xf32>
    %12 = arith.mulf %11, %11 : vector<8x32xf32>
    %cst_7 = arith.constant dense<0.000000e+00> : vector<8xf32>
    %13 = vector.multi_reduction <add>, %12, %cst_7 [1] : vector<8x32xf32> to vector<8xf32>
    %14 = vector.shape_cast %13 : vector<8xf32> to vector<8x1xf32>
    %cst_8 = arith.constant 3.200000e+01 : f32
    %15 = vector.broadcast %cst_8 : f32 to vector<8x1xf32>
    %16 = arith.divf %14, %15 : vector<8x1xf32>
    %cst_9 = arith.constant 9.99999974E-6 : f32
    %17 = vector.broadcast %cst_9 : f32 to vector<8x1xf32>
    %18 = arith.addf %16, %17 : vector<8x1xf32>
    %19 = math.rsqrt %18 : vector<8x1xf32>
    %20 = vector.broadcast %19 : vector<8x1xf32> to vector<8x32xf32>
    %21 = arith.mulf %11, %20 : vector<8x32xf32>
    %c0_10 = arith.constant 0 : index
    %c0_11 = arith.constant 0 : index
    %22 = vector.load %arg4[%c0_10, %c0_11] : memref<1x32xf32, #tpu.memory_space<vmem>>, vector<1x32xf32>
    %23 = vector.broadcast %22 : vector<1x32xf32> to vector<8x32xf32>
    %24 = arith.mulf %21, %23 : vector<8x32xf32>
    %c0_12 = arith.constant 0 : index
    %c0_13 = arith.constant 0 : index
    %25 = vector.load %arg5[%c0_12, %c0_13] : memref<1x32xf32, #tpu.memory_space<vmem>>, vector<1x32xf32>
    %26 = vector.broadcast %25 : vector<1x32xf32> to vector<8x32xf32>
    %27 = arith.addf %24, %26 : vector<8x32xf32>
    %cst_14 = arith.constant 0.000000e+00 : f32
    %28 = vector.broadcast %cst_14 : f32 to vector<8x32xf32>
    %29 = arith.maximumf %27, %28 : vector<8x32xf32>
    %c0_15 = arith.constant 0 : index
    %c0_16 = arith.constant 0 : index
    %30 = vector.load %arg6[%c0_15, %c0_16] : memref<1x32xf32, #tpu.memory_space<vmem>>, vector<1x32xf32>
    %cst_17 = arith.constant dense<0.000000e+00> : vector<1x8xf32>
    %31 = tpu.matmul %30, %29, %cst_17 {dimension_numbers = #tpu.dot_dimension_numbers<[1], [1], [0], [0], [0, 0, 1, 0], [], []>} : vector<1x32xf32>, vector<8x32xf32>, vector<1x8xf32> -> vector<1x8xf32>
    %c0_18 = arith.constant 0 : index
    %32 = memref.load %arg7[%c0_18] : memref<1xf32, #tpu.memory_space<smem>>
    %33 = vector.broadcast %32 : f32 to vector<1x8xf32>
    %34 = arith.addf %31, %33 : vector<1x8xf32>
    %35 = math.tanh %34 : vector<1x8xf32>
    %c0_19 = arith.constant 0 : index
    %c0_20 = arith.constant 0 : index
    %36 = vector.load %arg8[%c0_19, %c0_20] : memref<1x8xf32, #tpu.memory_space<vmem>>, vector<1x8xf32>
    tpu.vector_store %arg8[%c0_19, %c0_20], %35 {strides = array<i32>} : memref<1x8xf32, #tpu.memory_space<vmem>>, vector<1x8xf32>,
    return
  }
  func.func @transform_0(%arg0: i32) -> (i32, i32) {
    %c0_i32 = arith.constant 0 : i32
    %c0_i32_0 = arith.constant 0 : i32
    return %arg0, %c0_i32 : i32, i32
  }
  func.func @transform_1(%arg0: i32) -> (i32, i32) {
    %c0_i32 = arith.constant 0 : i32
    %c0_i32_0 = arith.constant 0 : i32
    %c0_i32_1 = arith.constant 0 : i32
    return %c0_i32, %c0_i32_0 : i32, i32
  }
  func.func @transform_2(%arg0: i32) -> (i32, i32) {
    %c0_i32 = arith.constant 0 : i32
    %c0_i32_0 = arith.constant 0 : i32
    %c0_i32_1 = arith.constant 0 : i32
    return %c0_i32, %c0_i32_0 : i32, i32
  }
  func.func @transform_3(%arg0: i32) -> (i32, i32) {
    %c0_i32 = arith.constant 0 : i32
    %c0_i32_0 = arith.constant 0 : i32
    %c0_i32_1 = arith.constant 0 : i32
    return %c0_i32, %c0_i32_0 : i32, i32
  }
  func.func @transform_4(%arg0: i32) -> (i32, i32) {
    %c0_i32 = arith.constant 0 : i32
    %c0_i32_0 = arith.constant 0 : i32
    %c0_i32_1 = arith.constant 0 : i32
    return %c0_i32, %c0_i32_0 : i32, i32
  }
  func.func @transform_5(%arg0: i32) -> (i32, i32) {
    %c0_i32 = arith.constant 0 : i32
    %c0_i32_0 = arith.constant 0 : i32
    %c0_i32_1 = arith.constant 0 : i32
    return %c0_i32, %c0_i32_0 : i32, i32
  }
  func.func @transform_6(%arg0: i32) -> i32 {
    %c0_i32 = arith.constant 0 : i32
    %c0_i32_0 = arith.constant 0 : i32
    return %c0_i32 : i32
  }
  func.func @transform_7(%arg0: i32) -> (i32, i32) {
    %c0_i32 = arith.constant 0 : i32
    %c0_i32_0 = arith.constant 0 : i32
    return %c0_i32, %arg0 : i32, i32
  }
}

</mosaic_0001>

<llo_original>
// kernel: tpu_custom_call.1
$region0: #{tpu_custom_call.1}
  #allocation0 [shape = 'u32[]', space=smem, size = 0x4, offset = 0x4, fixed_abs, tag = 'smem constant byte address 0x4 - core index']
  #allocation1 [shape = 'u32[144,128]{1,0:T(1,128)}', space=vmem, size = 0x12000, scoped, tag = 'internal scratch']
  #allocation2 [shape = 'f32[1]{0:T(128)S(6)}', space=smem, size = 0x200, scoped, tag = 'scoped memory for tpu_custom_call.1']
  %s0 = inlined_call_operand.hbm [shape: f32[8,32], index: 0, kind: input, shape index: {}]
  %s1 = inlined_call_operand.hbm [shape: f32[32,32], index: 1, kind: input, shape index: {}]
  %s2 = inlined_call_operand.vmem [shape: f32[1,32], index: 2, kind: input, shape index: {}]
  %s3 = inlined_call_operand.vmem [shape: f32[1,32], index: 3, kind: input, shape index: {}]
  %s4 = inlined_call_operand.vmem [shape: f32[1,32], index: 4, kind: input, shape index: {}]
  %s5 = inlined_call_operand.vmem [shape: f32[1,32], index: 5, kind: input, shape index: {}]
  %s6 = inlined_call_operand.<no memory space> [shape: f32[1], index: 6, kind: input, shape index: {}]
  %s7 = inlined_call_operand.hbm [shape: f32[1,8], index: 7, kind: output, shape index: {}]
  %s8 = sld [smem:[#allocation0]]
  $region46: #{tpu_custom_call.1} parent=0
    _
  %s10 = ssub.s32 1, %s8
  %s11 = scalar_select 0, %s10, %s8
  %12 = sst [smem:[#allocation2]] %s6
  $region1: #{tpu_custom_call.1} parent=0
    #allocation3 [shape = 'u8[4096]{0}', space=vmem, size = 0x1000, scoped, tag = 'input window, operand 0, single buffered']
    #allocation4 [shape = 's32[1]{0}', space=sflag, size = 0x4, scoped, tag = 'scoped memory for tpu_custom_call.1']
    #allocation5 [shape = 's32[1]{0}', space=sflag, size = 0x4, scoped, tag = 'scoped memory for tpu_custom_call.1']
    #allocation6 [shape = 'u8[16384]{0}', space=vmem, size = 0x4000, scoped, tag = 'input window, operand 1, single buffered']
    #allocation7 [shape = 's32[1]{0}', space=sflag, size = 0x4, scoped, tag = 'scoped memory for tpu_custom_call.1']
    #allocation8 [shape = 'u8[512]{0}', space=vmem, size = 0x400, scoped, tag = 'output window, operand 0, single buffered']
    %13 = vsyncpa [#allocation4], 0
    %14 = vsyncpa [#allocation7], 0
    %15 = vsyncpa [#allocation5], 0
    // Predicated region
    $region2: #{tpu_custom_call.1} parent=1 // pred_check
      _
    $region3: #{tpu_custom_call.1} parent=1 // pred_check_branch
      %17 = sbr.rel (0) target = $region5
    $region4: #{tpu_custom_call.1} parent=1 // pred_region
      %s19 = ssub.s32 128, 128
      %20 = vsyncadd [#allocation4], %s19
      %s22 = sshll.u32 [#allocation3], 4
      %s23 = int_to_ptr.vmem [resolvable:$true] %s22
      %25 = dma.hbm_to_vmem [thread:$0]  %s0, 128, %s23, [#allocation4]
    $region5: #{tpu_custom_call.1} parent=1 // pred_fallthru
      _
    // Predicated region
    $region6: #{tpu_custom_call.1} parent=1 // pred_check
      _
    $region7: #{tpu_custom_call.1} parent=1 // pred_check_branch
      %27 = sbr.rel (0) target = $region9
    $region8: #{tpu_custom_call.1} parent=1 // pred_region
      %s29 = ssub.s32 512, 512
      %30 = vsyncadd [#allocation7], %s29
      %s31 = sshll.u32 [#allocation6], 4
      %s32 = int_to_ptr.vmem [resolvable:$true] %s31
      %37 = dma.hbm_to_vmem [thread:$0]  %s1, 512, %s32, [#allocation7], 128, 128, 8
    $region9: #{tpu_custom_call.1} parent=1 // pred_fallthru
      _
    // Predicated region
    $region10: #{tpu_custom_call.1} parent=1 // pred_check
      _
    $region11: #{tpu_custom_call.1} parent=1 // pred_check_branch
      %39 = sbr.rel (0) target = $region13
    $region12: #{tpu_custom_call.1} parent=1 // pred_region
      _
    $region13: #{tpu_custom_call.1} parent=1 // pred_fallthru
      _
    // Predicated region
    $region14: #{tpu_custom_call.1} parent=1 // pred_check
      _
    $region15: #{tpu_custom_call.1} parent=1 // pred_check_branch
      %41 = sbr.rel (0) target = $region17
    $region16: #{tpu_custom_call.1} parent=1 // pred_region
      _
    $region17: #{tpu_custom_call.1} parent=1 // pred_fallthru
      _
    // Predicated region
    $region18: #{tpu_custom_call.1} parent=1 // pred_check
      _
    $region19: #{tpu_custom_call.1} parent=1 // pred_check_branch
      %43 = sbr.rel (0) target = $region21
    $region20: #{tpu_custom_call.1} parent=1 // pred_region
      _
    $region21: #{tpu_custom_call.1} parent=1 // pred_fallthru
      _
    // Predicated region
    $region22: #{tpu_custom_call.1} parent=1 // pred_check
      _
    $region23: #{tpu_custom_call.1} parent=1 // pred_check_branch
      %45 = sbr.rel (0) target = $region25
    $region24: #{tpu_custom_call.1} parent=1 // pred_region
      _
    $region25: #{tpu_custom_call.1} parent=1 // pred_fallthru
      _
    // Predicated region
    $region26: #{tpu_custom_call.1} parent=1 // pred_check
      _
    $region27: #{tpu_custom_call.1} parent=1 // pred_check_branch
      %47 = sbr.rel (0) target = $region29
    $region28: #{tpu_custom_call.1} parent=1 // pred_region
      _
    $region29: #{tpu_custom_call.1} parent=1 // pred_fallthru
      _
    // Predicated region
    $region30: #{tpu_custom_call.1} parent=1 // pred_check
      _
    $region31: #{tpu_custom_call.1} parent=1 // pred_check_branch
      %49 = sbr.rel (0) target = $region33
    $region32: #{tpu_custom_call.1} parent=1 // pred_region
      %50 = dma.done [#allocation4], 128
    $region33: #{tpu_custom_call.1} parent=1 // pred_fallthru
      _
    // Predicated region
    $region34: #{tpu_custom_call.1} parent=1 // pred_check
      _
    $region35: #{tpu_custom_call.1} parent=1 // pred_check_branch
      %52 = sbr.rel (0) target = $region37
    $region36: #{tpu_custom_call.1} parent=1 // pred_region
      %53 = dma.done [#allocation7], 512
    $region37: #{tpu_custom_call.1} parent=1 // pred_fallthru
      _
    %v54 = vld [vmem:[#allocation3] sm:$0xff]
    %v55 = vld [vmem:[#allocation6] sm:$0xff]
    %v56 = vld [vmem:[#allocation6 + $0x8] sm:$0xff]
    %v57 = vld [vmem:[#allocation6 + $0x10] sm:$0xff]
    %v58 = vld [vmem:[#allocation6 + $0x18] sm:$0xff]
    %v59 = vld [vmem:[%s2] sm:$0x1]
    %v61 = vlaneseq
    %v62 = vshrl.u32 %v61, 7
    %v63 = vsub.s32 0, %v62
    %v64 = vrot.slane %v59, %v63
    %vm66 = vcmask 261120
    %v68 = vsel %vm66, %v54, 0
    %70 = vmatprep.subr.mxu0 0.0
    %71 = vmatpush1.msra.mxu0 %v55
    %72 = vmatprep.subr.mxu0 0.0
    %73 = vmatpush1.msra.mxu0 %v56
    %74 = vmatprep.subr.mxu0 0.0
    %75 = vmatpush1.msra.mxu0 %v57
    %76 = vmatprep.subr.mxu0 0.0
    %77 = vmatpush1.msra.mxu0 %v58
    %78 = vmatprep.subr.mxu0 0.0
    %79 = vmatpush1.msra.mxu0 0.0
    %80 = vmatprep.subr.mxu0 0.0
    %81 = vmatpush1.msra.mxu0 0.0
    %82 = vmatprep.subr.mxu0 0.0
    %83 = vmatpush1.msra.mxu0 0.0
    %84 = vmatprep.subr.mxu0 0.0
    %85 = vmatpush1.msra.mxu0 0.0
    %86 = vmatprep.subr.mxu0 0.0
    %87 = vmatpush1.msra.mxu0 0.0
    %88 = vmatprep.subr.mxu0 0.0
    %89 = vmatpush1.msra.mxu0 0.0
    %90 = vmatprep.subr.mxu0 0.0
    %91 = vmatpush1.msra.mxu0 0.0
    %92 = vmatprep.subr.mxu0 0.0
    %93 = vmatpush1.msra.mxu0 0.0
    %94 = vmatprep.subr.mxu0 0.0
    %95 = vmatpush1.msra.mxu0 0.0
    %96 = vmatprep.subr.mxu0 0.0
    %97 = vmatpush1.msra.mxu0 0.0
    %98 = vmatprep.subr.mxu0 0.0
    %99 = vmatpush1.msra.mxu0 0.0
    %100 = vmatprep.subr.mxu0 0.0
    %101 = vmatpush1.msra.mxu0 0.0
    %102 = vmatprep.subr.mxu0 0.0
    %103 = vmatpush1.msra.mxu0 0.0
    %104 = vmatprep.subr.mxu0 0.0
    %105 = vmatpush1.msra.mxu0 0.0
    %106 = vmatprep.subr.mxu0 0.0
    %107 = vmatpush1.msra.mxu0 0.0
    %108 = vmatprep.subr.mxu0 0.0
    %109 = vmatpush1.msra.mxu0 0.0
    %110 = vmatprep.subr.mxu0 0.0
    %111 = vmatpush1.msra.mxu0 0.0
    %112 = vmatprep.subr.mxu0 0.0
    %113 = vmatpush1.msra.mxu0 0.0
    %114 = vmatprep.subr.mxu0 0.0
    %115 = vmatpush1.msra.mxu0 0.0
    %116 = vmatprep.subr.mxu0 0.0
    %117 = vmatpush1.msra.mxu0 0.0
    %118 = vmatprep.subr.mxu0 0.0
    %119 = vmatpush1.msra.mxu0 0.0
    %120 = vmatprep.subr.mxu0 0.0
    %121 = vmatpush1.msra.mxu0 0.0
    %122 = vmatprep.subr.mxu0 0.0
    %123 = vmatpush1.msra.mxu0 0.0
    %124 = vmatprep.subr.mxu0 0.0
    %125 = vmatpush1.msra.mxu0 0.0
    %126 = vmatprep.subr.mxu0 0.0
    %127 = vmatpush1.msra.mxu0 0.0
    %128 = vmatprep.subr.mxu0 0.0
    %129 = vmatpush1.msra.mxu0 0.0
    %130 = vmatprep.subr.mxu0 0.0
    %131 = vmatpush1.msra.mxu0 0.0
    %132 = vmatprep.subr.mxu0 0.0
    %133 = vmatpush1.msra.mxu0 0.0
    %134 = vmatprep.mubr.f32.mxu0 0.0
    %135 = vmatmul.mubr.f32.gmra.mrb[0].mxu0 %v68
    %v136 = vpop.f32.mrb[0].mxu0
    %v137 = vadd.f32 %v64, %v136
    %v138 = vpop.f32.mrb[0].mxu0
    %139 = vdwg.mxu0
    %v140 = vsel %vm66, %v137, 0.0
    %141 = vadd.xlane.f32.xlu0 %v140
    %v142 = vpop.xlane.xlu0 %141
    %v143 = vrcp.pop 32.0
    %v144 = vmul.f32 %v142, %v143
    %v145 = vsub.f32 %v137, %v144
    %v146 = vmul.f32 %v145, %v145
    %v147 = vsel %vm66, %v146, 0.0
    %148 = vadd.xlane.f32.xlu0 %v147
    %v149 = vpop.xlane.xlu0 %148
    %v150 = vmul.f32 %v149, %v143
    %v151 = vadd.f32 %v150, 1e-05
    %v152 = vrsqrt.pop %v151
    %v153 = vmul.f32 %v145, %v152
    %v154 = vld [vmem:[%s3] sm:$0x1]
    %v156 = vlaneseq
    %v157 = vshrl.u32 %v156, 7
    %v158 = vsub.s32 0, %v157
    %v159 = vrot.slane %v154, %v158
    %v161 = vmul.f32 %v153, %v159
    %v162 = vld [vmem:[%s4] sm:$0x1]
    %v164 = vlaneseq
    %v165 = vshrl.u32 %v164, 7
    %v166 = vsub.s32 0, %v165
    %v167 = vrot.slane %v162, %v166
    %v169 = vadd.f32 %v161, %v167
    %v170 = vmax.f32 %v169, 0.0
    %v171 = vld [vmem:[%s5] sm:$0x1]
    %s172 = sld [smem:[#allocation2]]
    %v173 = vstv %s172
    %v175 = vsel %vm66, %v171, 0
    %v178 = vsel %vm66, %v170, 0
    %180 = vmatprep.subr.mxu0 0.0
    %181 = vmatpush1.xpose.msra.mxu0 %v178
    %182 = vmatprep.subr.mxu0 0.0
    %183 = vmatpush1.xpose.msra.mxu0 0.0
    %184 = vmatprep.subr.mxu0 0.0
    %185 = vmatpush1.xpose.msra.mxu0 0.0
    %186 = vmatprep.subr.mxu0 0.0
    %187 = vmatpush1.xpose.msra.mxu0 0.0
    %188 = vmatprep.subr.mxu0 0.0
    %189 = vmatpush1.xpose.msra.mxu0 0.0
    %190 = vmatprep.subr.mxu0 0.0
    %191 = vmatpush1.xpose.msra.mxu0 0.0
    %192 = vmatprep.subr.mxu0 0.0
    %193 = vmatpush1.xpose.msra.mxu0 0.0
    %194 = vmatprep.subr.mxu0 0.0
    %195 = vmatpush1.xpose.msra.mxu0 0.0
    %196 = vmatprep.subr.mxu0 0.0
    %197 = vmatpush1.xpose.msra.mxu0 0.0
    %198 = vmatprep.subr.mxu0 0.0
    %199 = vmatpush1.xpose.msra.mxu0 0.0
    %200 = vmatprep.subr.mxu0 0.0
    %201 = vmatpush1.xpose.msra.mxu0 0.0
    %202 = vmatprep.subr.mxu0 0.0
    %203 = vmatpush1.xpose.msra.mxu0 0.0
    %204 = vmatprep.subr.mxu0 0.0
    %205 = vmatpush1.xpose.msra.mxu0 0.0
    %206 = vmatprep.subr.mxu0 0.0
    %207 = vmatpush1.xpose.msra.mxu0 0.0
    %208 = vmatprep.subr.mxu0 0.0
    %209 = vmatpush1.xpose.msra.mxu0 0.0
    %210 = vmatprep.subr.mxu0 0.0
    %211 = vmatpush1.xpose.msra.mxu0 0.0
    %212 = vmatprep.subr.mxu0 0.0
    %213 = vmatpush1.xpose.msra.mxu0 0.0
    %214 = vmatprep.subr.mxu0 0.0
    %215 = vmatpush1.xpose.msra.mxu0 0.0
    %216 = vmatprep.subr.mxu0 0.0
    %217 = vmatpush1.xpose.msra.mxu0 0.0
    %218 = vmatprep.subr.mxu0 0.0
    %219 = vmatpush1.xpose.msra.mxu0 0.0
    %220 = vmatprep.subr.mxu0 0.0
    %221 = vmatpush1.xpose.msra.mxu0 0.0
    %222 = vmatprep.subr.mxu0 0.0
    %223 = vmatpush1.xpose.msra.mxu0 0.0
    %224 = vmatprep.subr.mxu0 0.0
    %225 = vmatpush1.xpose.msra.mxu0 0.0
    %226 = vmatprep.subr.mxu0 0.0
    %227 = vmatpush1.xpose.msra.mxu0 0.0
    %228 = vmatprep.subr.mxu0 0.0
    %229 = vmatpush1.xpose.msra.mxu0 0.0
    %230 = vmatprep.subr.mxu0 0.0
    %231 = vmatpush1.xpose.msra.mxu0 0.0
    %232 = vmatprep.subr.mxu0 0.0
    %233 = vmatpush1.xpose.msra.mxu0 0.0
    %234 = vmatprep.subr.mxu0 0.0
    %235 = vmatpush1.xpose.msra.mxu0 0.0
    %236 = vmatprep.subr.mxu0 0.0
    %237 = vmatpush1.xpose.msra.mxu0 0.0
    %238 = vmatprep.subr.mxu0 0.0
    %239 = vmatpush1.xpose.msra.mxu0 0.0
    %240 = vmatprep.subr.mxu0 0.0
    %241 = vmatpush1.xpose.msra.mxu0 0.0
    %242 = vmatprep.subr.mxu0 0.0
    %243 = vmatpush1.xpose.msra.mxu0 0.0
    %244 = vmatprep.mubr.f32.mxu0 0.0
    %245 = vmatmul.mubr.f32.gmra.mrb[0].mxu0 %v175
    %v246 = vpop.f32.mrb[0].mxu0
    %v247 = vadd.f32 %v173, %v246
    %v248 = vpop.f32.mrb[0].mxu0
    %249 = vdwg.mxu0
    %v250 = vtanh.pop %v247
    %vm251 = vcmask 57344
    %252 = vst.msk [vmem:[#allocation8] sm:$0x1] %vm251, %v250
    // Predicated region
    $region38: #{tpu_custom_call.1} parent=1 // pred_check
      _
    $region39: #{tpu_custom_call.1} parent=1 // pred_check_branch
      %254 = sbr.rel (0) target = $region41
    $region40: #{tpu_custom_call.1} parent=1 // pred_region
      %s256 = ssub.s32 16, 16
      %257 = vsyncadd [#allocation5], %s256
      %s259 = sshll.u32 [#allocation8], 4
      %s260 = int_to_ptr.vmem [resolvable:$true] %s259
      %262 = dma.vmem_to_hbm [thread:$0]  %s260, 16, %s7, [#allocation5]
    $region41: #{tpu_custom_call.1} parent=1 // pred_fallthru
      _
    // Predicated region
    $region42: #{tpu_custom_call.1} parent=1 // pred_check
      _
    $region43: #{tpu_custom_call.1} parent=1 // pred_check_branch
      %264 = sbr.rel (0) target = $region45
    $region44: #{tpu_custom_call.1} parent=1 // pred_region
      %265 = dma.done [#allocation5], 16
    $region45: #{tpu_custom_call.1} parent=1 // pred_fallthru
      _
    %266 = vsyncpa [#allocation4], 1
    %267 = vsyncpa [#allocation7], 1
    %268 = vsyncpa [#allocation5], 1

</llo_original>
